<compile_context>
chip_gen: v7x
topology: tpu7x:2x2x1
jax: 0.10.0
libtpu: 0.0.40
codegen_flags: <defaults>
</compile_context>

<pallas_src>
import functools
import math

import numpy as np
import jax
import jax.numpy as jnp
from jax.experimental import pallas as pl
from jax.experimental.pallas import tpu as pltpu


def _token_embedding_kernel(x_ref, wctx_ref, bctx_ref, wse_ref, bse_ref, wtok_ref, o_ref, *, W):
    xf = x_ref[...]                           # (N, C) flat rows, N = block_b * W
    N, C = xf.shape
    Bt = N // W
    x3 = xf.reshape(Bt, W, C)                 # free view when W % 8 == 0

    # ---- contextConv: Conv1d(C->C, k=3, zero 'same' padding, + bias) along time.
    #      Shift the input by +-1 time step (zero boundary row), then accumulate
    #      three (N, C) @ (C, C) MXU matmuls (3C << 128 -> no lane-axis tap concat).
    zrow = jnp.zeros((Bt, 1, C), xf.dtype)
    x_prev = jnp.concatenate([zrow, x3[:, :W - 1]], axis=1).reshape(N, C)     # x[t-1], 0 at t=0
    x_next = jnp.concatenate([x3[:, 1:], zrow], axis=1).reshape(N, C)         # x[t+1], 0 at t=W-1
    ctx = (jnp.dot(x_prev, wctx_ref[0], preferred_element_type=jnp.float32)
           + jnp.dot(xf,     wctx_ref[1], preferred_element_type=jnp.float32)
           + jnp.dot(x_next, wctx_ref[2], preferred_element_type=jnp.float32)
           + bctx_ref[...])                                                    # (N, C)

    # ---- structure embedding (batched, no per-batch loop / stack):
    #      sn_b = row-normalized x_b;  xse_b = relu(Wse @ (sn_b^T sn_b) + bse)
    #           = relu((Wse sn_b^T) sn_b + bse)
    inv = jax.lax.rsqrt(jnp.sum(xf * xf, axis=-1, keepdims=True) + 1e-24)      # EUP
    sn = (xf * inv).reshape(Bt, W, C)
    wse_b = jnp.broadcast_to(wse_ref[...], (Bt, W, C))                         # hoisted once
    # a[b,t,w] = sum_c Wse[t,c] * sn[b,w,c]        ('btc,bwc->btw', contract last dims)
    a = jax.lax.dot_general(wse_b, sn, (((2,), (2,)), ((0,), (0,))),
                            preferred_element_type=jnp.float32)                # (Bt, W, W)
    # xse[b,t,j] = relu(sum_w a[b,t,w] * sn[b,w,j] + bse[t])   ('btw,bwc->btc')
    xse = jnp.maximum(
        jax.lax.dot_general(a, sn, (((2,), (1,)), ((0,), (0,))),
                            preferred_element_type=jnp.float32) + bse_ref[...],
        0.0)                                                                   # (Bt, W, C)

    h = ctx + xse.reshape(N, C)
    h3 = h.reshape(Bt, W, C)

    # ---- tokenConv: Conv1d(C->D, k=3, circular padding, no bias) along time,
    #      three accumulated (N, C) @ (C, Dp) matmuls on circularly shifted input.
    h_prev = jnp.concatenate([h3[:, W - 1:], h3[:, :W - 1]], axis=1).reshape(N, C)  # h[(t-1)%W]
    h_next = jnp.concatenate([h3[:, 1:], h3[:, :1]], axis=1).reshape(N, C)          # h[(t+1)%W]
    out = (jnp.dot(h_prev, wtok_ref[0], preferred_element_type=jnp.float32)
           + jnp.dot(h,      wtok_ref[1], preferred_element_type=jnp.float32)
           + jnp.dot(h_next, wtok_ref[2], preferred_element_type=jnp.float32))
    o_ref[...] = out.astype(o_ref.dtype)                                       # (N, Dp) lane-dense


_VMEM_BLOCK_BUDGET = 20 * 1024 * 1024     # keep blocks + f32 temps far inside v7x's 64 MiB


def _tensorcores_per_chip():
    """2 on v7x-class parts (so two grid steps can run on both TCs), else 1."""
    try:
        d = jax.devices()[0]
        if d.platform != "tpu":
            return 1
        kind = str(getattr(d, "device_kind", "")).lower()
        if "v7" in kind or "7x" in kind:
            return 2
        nc = getattr(d, "num_cores", None)
        if isinstance(nc, int) and nc >= 2:
            return 2
        return 1
    except Exception:
        return 1


def _vmem_block_bytes(block_b, W, C, Dp):
    rows = block_b * W
    io = 2 * rows * (C + Dp) * 4                                   # double-buffered in/out blocks
    inter = rows * (7 * C + 2 * Dp) * 4 + block_b * W * W * 4      # f32 temporaries
    wts = (3 * C * C + C + W * C + W + 3 * C * Dp) * 4
    return io + inter + wts


def token_embedding(x, w_ctx, b_ctx, w_se, b_se, w_tok, *, block_b=None):
    """x: (B, W, C); w_ctx: (3, C, C); b_ctx: (1, C); w_se: (W, C); b_se: (W, 1);
    w_tok: (3, C, D).  Returns (B, W, D) float32."""
    B, W, C = x.shape
    D = w_tok.shape[-1]

    # Lane-dense output: pad d_model up to a multiple of 128 (zero weight columns)
    # so the kernel issues unmasked full-lane stores; sliced off below.
    Dp = ((D + 127) // 128) * 128
    w_tok_p = w_tok if Dp == D else jnp.pad(w_tok, ((0, 0), (0, 0), (0, Dp - D)))

    # ---- batch-block policy (generation aware) -------------------------------
    # single-TC v5e/v6e: one grid step; dual-TC v7x: two balanced steps; block
    # size capped against a VMEM budget.
    if block_b is None:
        n_tc = _tensorcores_per_chip()
        block_b = B if n_tc <= 1 else -(-B // n_tc)
        while block_b > 1 and _vmem_block_bytes(block_b, W, C, Dp) > _VMEM_BLOCK_BUDGET:
            block_b = -(-block_b // 2)
    block_b = max(1, min(int(block_b), B))
    # When the batch is split, keep each block's flat row count a multiple of 8
    # so the (rows, C) blocks are sublane-tile aligned and in-kernel reshapes are free.
    if block_b < B:
        m = 8 // math.gcd(W, 8)
        block_b = -(-block_b // m) * m
        if block_b >= B:
            block_b = B

    n_blocks = -(-B // block_b)
    Bp = n_blocks * block_b
    x_p = x if Bp == B else jnp.pad(x, ((0, Bp - B), (0, 0), (0, 0)))
    x_flat = x_p.reshape(Bp * W, C)            # flat (batch*time, channel) rows
    rows = block_b * W

    cost = pl.CostEstimate(
        flops=int(2 * Bp * W * (3 * C * C + 3 * C * Dp + 2 * W * C)),
        transcendentals=int(Bp * W),
        bytes_accessed=int(4 * (Bp * W * (C + Dp) + 3 * C * C + C + W * C + W + 3 * C * Dp)),
    )

    out_flat = pl.pallas_call(
        functools.partial(_token_embedding_kernel, W=W),
        out_shape=jax.ShapeDtypeStruct((Bp * W, Dp), jnp.float32),
        grid=(n_blocks,),
        in_specs=[
            pl.BlockSpec((rows, C),   lambda i: (i, 0)),
            pl.BlockSpec((3, C, C),   lambda i: (0, 0, 0)),   # constant index -> resident
            pl.BlockSpec((1, C),      lambda i: (0, 0)),
            pl.BlockSpec((W, C),      lambda i: (0, 0)),
            pl.BlockSpec((W, 1),      lambda i: (0, 0)),
            pl.BlockSpec((3, C, Dp),  lambda i: (0, 0, 0)),
        ],
        out_specs=pl.BlockSpec((rows, Dp), lambda i: (i, 0)),
        compiler_params=pltpu.CompilerParams(
            dimension_semantics=("parallel",),
            vmem_limit_bytes=32 * 1024 * 1024,
        ),
        cost_estimate=cost,
    )(x_flat, w_ctx, b_ctx, w_se, b_se, w_tok_p)

    return out_flat.reshape(Bp, W, Dp)[:B, :, :D]


def reference(x, w_ctx, b_ctx, w_se, b_se, w_tok):
    """Pure-JAX reference with the same parameter layouts as the kernel."""
    # contextConv (zero 'same' padding, + bias)
    xp = jnp.pad(x, ((0, 0), (1, 1), (0, 0)))
    ctx = xp[:, :-2] @ w_ctx[0] + xp[:, 1:-1] @ w_ctx[1] + xp[:, 2:] @ w_ctx[2] + b_ctx
    # structure embedding (original formulation: gram -> seW -> relu -> transpose)
    inv = jax.lax.rsqrt(jnp.sum(x * x, axis=-1, keepdims=True) + 1e-24)
    sn = x * inv
    gram = jnp.einsum('bwi,bwj->bij', sn, sn)
    se = jax.nn.relu(jnp.einsum('bij,tj->bit', gram, w_se) + b_se[:, 0][None, None, :])  # (B,C,W)
    xse = jnp.transpose(se, (0, 2, 1))                                                   # (B,W,C)
    h = ctx + xse
    # tokenConv (circular padding, no bias)
    hp = jnp.concatenate([h[:, -1:], h, h[:, :1]], axis=1)
    return hp[:, :-2] @ w_tok[0] + hp[:, 1:-1] @ w_tok[1] + hp[:, 2:] @ w_tok[2]


if __name__ == "__main__":
    B, W, C, D = 2, 8, 4, 32   # batch, input_window, c_in, d_model

    key = jax.random.PRNGKey(0)
    kx, k1, k2, k3, k4, k5 = jax.random.split(key, 6)

    x = jax.random.normal(kx, (B, W, C), dtype=jnp.float32)

    # contextConv weights (kaiming-ish scale), stored as (k, in, out) for direct matmul
    w_ctx = jax.random.normal(k1, (3, C, C), dtype=jnp.float32) * np.sqrt(2.0 / (3 * C))
    b_ctx = jax.random.normal(k2, (1, C), dtype=jnp.float32) * 0.1
    # seW = Linear(C -> W): weight (W, C), bias (W, 1)
    w_se = jax.random.normal(k3, (W, C), dtype=jnp.float32) * np.sqrt(1.0 / C)
    b_se = jax.random.normal(k4, (W, 1), dtype=jnp.float32) * 0.1
    # tokenConv weights (d_model <- c_in, k=3, no bias), stored as (k, in, out)
    w_tok = jax.random.normal(k5, (3, C, D), dtype=jnp.float32) * np.sqrt(2.0 / (3 * C))

    out = token_embedding(x, w_ctx, b_ctx, w_se, b_se, w_tok)
    out = jax.block_until_ready(out)

    ref = reference(x, w_ctx, b_ctx, w_se, b_se, w_tok)
    np.testing.assert_allclose(np.asarray(out), np.asarray(ref), rtol=1e-4, atol=1e-4)
    assert out.shape == (B, W, D)

    print("KERNEL_OK")
</pallas_src>

<mosaic_0001>
module attributes {stable_mosaic.version = 11 : i64} {
  func.func @_token_embedding_kernel(%arg0: i32, %arg1: memref<16x4xf32, #tpu.memory_space<vmem>>, %arg2: memref<3x4x4xf32, #tpu.memory_space<vmem>>, %arg3: memref<1x4xf32, #tpu.memory_space<vmem>>, %arg4: memref<8x4xf32, #tpu.memory_space<vmem>>, %arg5: memref<8x1xf32, #tpu.memory_space<vmem>>, %arg6: memref<3x4x128xf32, #tpu.memory_space<vmem>>, %arg7: memref<16x128xf32, #tpu.memory_space<vmem>>) attributes {dimension_semantics = [#tpu.dimension_semantics<parallel>], iteration_bounds = array<i64: 1>, scalar_prefetch = 0 : i64, scratch_operands = 0 : i64, tpu.core_type = #tpu.core_type<tc>, window_params = [{transform_indices = @transform_0, window_bounds = array<i64: 16, 4>}, {pipeline_mode = #tpu.pipeline_mode<synchronous>, transform_indices = @transform_1, window_bounds = array<i64: 3, 4, 4>}, {pipeline_mode = #tpu.pipeline_mode<synchronous>, transform_indices = @transform_2, window_bounds = array<i64: 1, 4>}, {pipeline_mode = #tpu.pipeline_mode<synchronous>, transform_indices = @transform_3, window_bounds = array<i64: 8, 4>}, {pipeline_mode = #tpu.pipeline_mode<synchronous>, transform_indices = @transform_4, window_bounds = array<i64: 8, 1>}, {pipeline_mode = #tpu.pipeline_mode<synchronous>, transform_indices = @transform_5, window_bounds = array<i64: 3, 4, 128>}, {transform_indices = @transform_6, window_bounds = array<i64: 16, 128>}]} {
    %c0 = arith.constant 0 : index
    %c0_0 = arith.constant 0 : index
    %0 = vector.load %arg1[%c0, %c0_0] : memref<16x4xf32, #tpu.memory_space<vmem>>, vector<16x4xf32>
    %1 = vector.shape_cast %0 : vector<16x4xf32> to vector<2x8x4xf32>
    %cst = arith.constant 0.000000e+00 : f32
    %2 = vector.broadcast %cst : f32 to vector<2x1x4xf32>
    %3 = vector.extract_strided_slice %1 {offsets = [0, 0, 0], sizes = [2, 7, 4], strides = [1, 1, 1]} : vector<2x8x4xf32> to vector<2x7x4xf32>
    %4 = tpu.concatenate %2, %3 in 1 : vector<2x1x4xf32>, vector<2x7x4xf32> -> vector<2x8x4xf32>
    %5 = vector.shape_cast %4 : vector<2x8x4xf32> to vector<16x4xf32>
    %6 = vector.extract_strided_slice %1 {offsets = [0, 1, 0], sizes = [2, 7, 4], strides = [1, 1, 1]} : vector<2x8x4xf32> to vector<2x7x4xf32>
    %7 = tpu.concatenate %6, %2 in 1 : vector<2x7x4xf32>, vector<2x1x4xf32> -> vector<2x8x4xf32>
    %8 = vector.shape_cast %7 : vector<2x8x4xf32> to vector<16x4xf32>
    %c0_1 = arith.constant 0 : index
    %c0_2 = arith.constant 0 : index
    %c0_3 = arith.constant 0 : index
    %9 = vector.load %arg2[%c0_1, %c0_2, %c0_3] : memref<3x4x4xf32, #tpu.memory_space<vmem>>, vector<1x4x4xf32>
    %10 = vector.shape_cast %9 : vector<1x4x4xf32> to vector<4x4xf32>
    %cst_4 = arith.constant dense<0.000000e+00> : vector<16x4xf32>
    %11 = tpu.matmul %5, %10, %cst_4 {dimension_numbers = #tpu.dot_dimension_numbers<[1], [0], [0], [1], [0, 0, 1, 1], [], []>} : vector<16x4xf32>, vector<4x4xf32>, vector<16x4xf32> -> vector<16x4xf32>
    %c1 = arith.constant 1 : index
    %c0_5 = arith.constant 0 : index
    %c0_6 = arith.constant 0 : index
    %12 = vector.load %arg2[%c1, %c0_5, %c0_6] : memref<3x4x4xf32, #tpu.memory_space<vmem>>, vector<1x4x4xf32>
    %13 = vector.shape_cast %12 : vector<1x4x4xf32> to vector<4x4xf32>
    %cst_7 = arith.constant dense<0.000000e+00> : vector<16x4xf32>
    %14 = tpu.matmul %0, %13, %cst_7 {dimension_numbers = #tpu.dot_dimension_numbers<[1], [0], [0], [1], [0, 0, 1, 1], [], []>} : vector<16x4xf32>, vector<4x4xf32>, vector<16x4xf32> -> vector<16x4xf32>
    %15 = arith.addf %11, %14 : vector<16x4xf32>
    %c2 = arith.constant 2 : index
    %c0_8 = arith.constant 0 : index
    %c0_9 = arith.constant 0 : index
    %16 = vector.load %arg2[%c2, %c0_8, %c0_9] : memref<3x4x4xf32, #tpu.memory_space<vmem>>, vector<1x4x4xf32>
    %17 = vector.shape_cast %16 : vector<1x4x4xf32> to vector<4x4xf32>
    %cst_10 = arith.constant dense<0.000000e+00> : vector<16x4xf32>
    %18 = tpu.matmul %8, %17, %cst_10 {dimension_numbers = #tpu.dot_dimension_numbers<[1], [0], [0], [1], [0, 0, 1, 1], [], []>} : vector<16x4xf32>, vector<4x4xf32>, vector<16x4xf32> -> vector<16x4xf32>
    %19 = arith.addf %15, %18 : vector<16x4xf32>
    %c0_11 = arith.constant 0 : index
    %c0_12 = arith.constant 0 : index
    %20 = vector.load %arg3[%c0_11, %c0_12] : memref<1x4xf32, #tpu.memory_space<vmem>>, vector<1x4xf32>
    %21 = vector.broadcast %20 : vector<1x4xf32> to vector<16x4xf32>
    %22 = arith.addf %19, %21 : vector<16x4xf32>
    %23 = arith.mulf %0, %0 : vector<16x4xf32>
    %cst_13 = arith.constant dense<0.000000e+00> : vector<16xf32>
    %24 = vector.multi_reduction <add>, %23, %cst_13 [1] : vector<16x4xf32> to vector<16xf32>
    %25 = vector.shape_cast %24 : vector<16xf32> to vector<16x1xf32>
    %cst_14 = arith.constant 1.000000e-24 : f32
    %26 = vector.broadcast %cst_14 : f32 to vector<16x1xf32>
    %27 = arith.addf %25, %26 : vector<16x1xf32>
    %28 = math.rsqrt %27 : vector<16x1xf32>
    %29 = vector.broadcast %28 : vector<16x1xf32> to vector<16x4xf32>
    %30 = arith.mulf %0, %29 : vector<16x4xf32>
    %31 = vector.shape_cast %30 : vector<16x4xf32> to vector<2x8x4xf32>
    %c0_15 = arith.constant 0 : index
    %c0_16 = arith.constant 0 : index
    %32 = vector.load %arg4[%c0_15, %c0_16] : memref<8x4xf32, #tpu.memory_space<vmem>>, vector<8x4xf32>
    %33 = vector.shape_cast %32 : vector<8x4xf32> to vector<1x8x4xf32>
    %34 = vector.broadcast %33 : vector<1x8x4xf32> to vector<2x8x4xf32>
    %cst_17 = arith.constant dense<0.000000e+00> : vector<2x8x8xf32>
    %35 = tpu.matmul %34, %31, %cst_17 {dimension_numbers = #tpu.dot_dimension_numbers<[2], [2], [1], [1], [0, 0, 0, 1, 1, 1], [0], [0]>} : vector<2x8x4xf32>, vector<2x8x4xf32>, vector<2x8x8xf32> -> vector<2x8x8xf32>
    %cst_18 = arith.constant dense<0.000000e+00> : vector<2x8x4xf32>
    %36 = tpu.matmul %35, %31, %cst_18 {dimension_numbers = #tpu.dot_dimension_numbers<[2], [1], [1], [2], [0, 0, 0, 1, 1, 2], [0], [0]>} : vector<2x8x8xf32>, vector<2x8x4xf32>, vector<2x8x4xf32> -> vector<2x8x4xf32>
    %c0_19 = arith.constant 0 : index
    %c0_20 = arith.constant 0 : index
    %37 = vector.load %arg5[%c0_19, %c0_20] : memref<8x1xf32, #tpu.memory_space<vmem>>, vector<8x1xf32>
    %38 = vector.shape_cast %37 : vector<8x1xf32> to vector<1x8x1xf32>
    %39 = vector.broadcast %38 : vector<1x8x1xf32> to vector<2x8x4xf32>
    %40 = arith.addf %36, %39 : vector<2x8x4xf32>
    %cst_21 = arith.constant 0.000000e+00 : f32
    %41 = vector.broadcast %cst_21 : f32 to vector<2x8x4xf32>
    %42 = arith.maximumf %40, %41 : vector<2x8x4xf32>
    %43 = vector.shape_cast %42 : vector<2x8x4xf32> to vector<16x4xf32>
    %44 = arith.addf %22, %43 : vector<16x4xf32>
    %45 = vector.shape_cast %44 : vector<16x4xf32> to vector<2x8x4xf32>
    %46 = vector.extract_strided_slice %45 {offsets = [0, 7, 0], sizes = [2, 1, 4], strides = [1, 1, 1]} : vector<2x8x4xf32> to vector<2x1x4xf32>
    %47 = vector.extract_strided_slice %45 {offsets = [0, 0, 0], sizes = [2, 7, 4], strides = [1, 1, 1]} : vector<2x8x4xf32> to vector<2x7x4xf32>
    %48 = tpu.concatenate %46, %47 in 1 : vector<2x1x4xf32>, vector<2x7x4xf32> -> vector<2x8x4xf32>
    %49 = vector.shape_cast %48 : vector<2x8x4xf32> to vector<16x4xf32>
    %50 = vector.extract_strided_slice %45 {offsets = [0, 1, 0], sizes = [2, 7, 4], strides = [1, 1, 1]} : vector<2x8x4xf32> to vector<2x7x4xf32>
    %51 = vector.extract_strided_slice %45 {offsets = [0, 0, 0], sizes = [2, 1, 4], strides = [1, 1, 1]} : vector<2x8x4xf32> to vector<2x1x4xf32>
    %52 = tpu.concatenate %50, %51 in 1 : vector<2x7x4xf32>, vector<2x1x4xf32> -> vector<2x8x4xf32>
    %53 = vector.shape_cast %52 : vector<2x8x4xf32> to vector<16x4xf32>
    %c0_22 = arith.constant 0 : index
    %c0_23 = arith.constant 0 : index
    %c0_24 = arith.constant 0 : index
    %54 = vector.load %arg6[%c0_22, %c0_23, %c0_24] : memref<3x4x128xf32, #tpu.memory_space<vmem>>, vector<1x4x128xf32>
    %55 = vector.shape_cast %54 : vector<1x4x128xf32> to vector<4x128xf32>
    %cst_25 = arith.constant dense<0.000000e+00> : vector<16x128xf32>
    %56 = tpu.matmul %49, %55, %cst_25 {dimension_numbers = #tpu.dot_dimension_numbers<[1], [0], [0], [1], [0, 0, 1, 1], [], []>} : vector<16x4xf32>, vector<4x128xf32>, vector<16x128xf32> -> vector<16x128xf32>
    %c1_26 = arith.constant 1 : index
    %c0_27 = arith.constant 0 : index
    %c0_28 = arith.constant 0 : index
    %57 = vector.load %arg6[%c1_26, %c0_27, %c0_28] : memref<3x4x128xf32, #tpu.memory_space<vmem>>, vector<1x4x128xf32>
    %58 = vector.shape_cast %57 : vector<1x4x128xf32> to vector<4x128xf32>
    %cst_29 = arith.constant dense<0.000000e+00> : vector<16x128xf32>
    %59 = tpu.matmul %44, %58, %cst_29 {dimension_numbers = #tpu.dot_dimension_numbers<[1], [0], [0], [1], [0, 0, 1, 1], [], []>} : vector<16x4xf32>, vector<4x128xf32>, vector<16x128xf32> -> vector<16x128xf32>
    %60 = arith.addf %56, %59 : vector<16x128xf32>
    %c2_30 = arith.constant 2 : index
    %c0_31 = arith.constant 0 : index
    %c0_32 = arith.constant 0 : index
    %61 = vector.load %arg6[%c2_30, %c0_31, %c0_32] : memref<3x4x128xf32, #tpu.memory_space<vmem>>, vector<1x4x128xf32>
    %62 = vector.shape_cast %61 : vector<1x4x128xf32> to vector<4x128xf32>
    %cst_33 = arith.constant dense<0.000000e+00> : vector<16x128xf32>
    %63 = tpu.matmul %53, %62, %cst_33 {dimension_numbers = #tpu.dot_dimension_numbers<[1], [0], [0], [1], [0, 0, 1, 1], [], []>} : vector<16x4xf32>, vector<4x128xf32>, vector<16x128xf32> -> vector<16x128xf32>
    %64 = arith.addf %60, %63 : vector<16x128xf32>
    %c0_34 = arith.constant 0 : index
    %c0_35 = arith.constant 0 : index
    %65 = vector.load %arg7[%c0_34, %c0_35] : memref<16x128xf32, #tpu.memory_space<vmem>>, vector<16x128xf32>
    tpu.vector_store %arg7[%c0_34, %c0_35], %64 {strides = array<i32>} : memref<16x128xf32, #tpu.memory_space<vmem>>, vector<16x128xf32>,
    return
  }
  func.func @transform_0(%arg0: i32) -> (i32, i32) {
    %c0_i32 = arith.constant 0 : i32
    %c0_i32_0 = arith.constant 0 : i32
    return %arg0, %c0_i32 : i32, i32
  }
  func.func @transform_1(%arg0: i32) -> (i32, i32, i32) {
    %c0_i32 = arith.constant 0 : i32
    %c0_i32_0 = arith.constant 0 : i32
    %c0_i32_1 = arith.constant 0 : i32
    %c0_i32_2 = arith.constant 0 : i32
    return %c0_i32, %c0_i32_0, %c0_i32_1 : i32, i32, i32
  }
  func.func @transform_2(%arg0: i32) -> (i32, i32) {
    %c0_i32 = arith.constant 0 : i32
    %c0_i32_0 = arith.constant 0 : i32
    %c0_i32_1 = arith.constant 0 : i32
    return %c0_i32, %c0_i32_0 : i32, i32
  }
  func.func @transform_3(%arg0: i32) -> (i32, i32) {
    %c0_i32 = arith.constant 0 : i32
    %c0_i32_0 = arith.constant 0 : i32
    %c0_i32_1 = arith.constant 0 : i32
    return %c0_i32, %c0_i32_0 : i32, i32
  }
  func.func @transform_4(%arg0: i32) -> (i32, i32) {
    %c0_i32 = arith.constant 0 : i32
    %c0_i32_0 = arith.constant 0 : i32
    %c0_i32_1 = arith.constant 0 : i32
    return %c0_i32, %c0_i32_0 : i32, i32
  }
  func.func @transform_5(%arg0: i32) -> (i32, i32, i32) {
    %c0_i32 = arith.constant 0 : i32
    %c0_i32_0 = arith.constant 0 : i32
    %c0_i32_1 = arith.constant 0 : i32
    %c0_i32_2 = arith.constant 0 : i32
    return %c0_i32, %c0_i32_0, %c0_i32_1 : i32, i32, i32
  }
  func.func @transform_6(%arg0: i32) -> (i32, i32) {
    %c0_i32 = arith.constant 0 : i32
    %c0_i32_0 = arith.constant 0 : i32
    return %arg0, %c0_i32 : i32, i32
  }
}

</mosaic_0001>

<llo_original>
// kernel: tpu_custom_call.1
$region0: #{tpu_custom_call.1}
  #allocation0 [shape = 'u32[]', space=smem, size = 0x4, offset = 0x4, fixed_abs, tag = 'smem constant byte address 0x4 - core index']
  #allocation1 [shape = 'u32[144,128]{1,0:T(1,128)}', space=vmem, size = 0x12000, scoped, tag = 'internal scratch']
  %s0 = inlined_call_operand.vmem [shape: f32[16,4], index: 0, kind: input, shape index: {}]
  %s1 = inlined_call_operand.vmem [shape: f32[3,4,4], index: 1, kind: input, shape index: {}]
  %s2 = inlined_call_operand.vmem [shape: f32[1,4], index: 2, kind: input, shape index: {}]
  %s3 = inlined_call_operand.vmem [shape: f32[8,4], index: 3, kind: input, shape index: {}]
  %s4 = inlined_call_operand.vmem [shape: f32[8,1], index: 4, kind: input, shape index: {}]
  %s5 = inlined_call_operand.vmem [shape: f32[3,4,128], index: 5, kind: input, shape index: {}]
  %s6 = inlined_call_operand.hbm [shape: f32[16,128], index: 6, kind: output, shape index: {}]
  %s7 = sld [smem:[#allocation0]]
  $region34: #{tpu_custom_call.1} parent=0
    _
  %s9 = ssub.s32 1, %s7
  %s10 = scalar_select 0, %s9, %s7
  $region1: #{tpu_custom_call.1} parent=0
    #allocation2 [shape = 'u8[8192]{0}', space=vmem, size = 0x2000, scoped, tag = 'output window, operand 0, single buffered']
    #allocation3 [shape = 's32[1]{0}', space=sflag, size = 0x4, scoped, tag = 'scoped memory for tpu_custom_call.1']
    %11 = vsyncpa [#allocation3], 0
    // Predicated region
    $region2: #{tpu_custom_call.1} parent=1 // pred_check
      _
    $region3: #{tpu_custom_call.1} parent=1 // pred_check_branch
      %13 = sbr.rel (0) target = $region5
    $region4: #{tpu_custom_call.1} parent=1 // pred_region
      _
    $region5: #{tpu_custom_call.1} parent=1 // pred_fallthru
      _
    // Predicated region
    $region6: #{tpu_custom_call.1} parent=1 // pred_check
      _
    $region7: #{tpu_custom_call.1} parent=1 // pred_check_branch
      %15 = sbr.rel (0) target = $region9
    $region8: #{tpu_custom_call.1} parent=1 // pred_region
      _
    $region9: #{tpu_custom_call.1} parent=1 // pred_fallthru
      _
    // Predicated region
    $region10: #{tpu_custom_call.1} parent=1 // pred_check
      _
    $region11: #{tpu_custom_call.1} parent=1 // pred_check_branch
      %17 = sbr.rel (0) target = $region13
    $region12: #{tpu_custom_call.1} parent=1 // pred_region
      _
    $region13: #{tpu_custom_call.1} parent=1 // pred_fallthru
      _
    // Predicated region
    $region14: #{tpu_custom_call.1} parent=1 // pred_check
      _
    $region15: #{tpu_custom_call.1} parent=1 // pred_check_branch
      %19 = sbr.rel (0) target = $region17
    $region16: #{tpu_custom_call.1} parent=1 // pred_region
      _
    $region17: #{tpu_custom_call.1} parent=1 // pred_fallthru
      _
    // Predicated region
    $region18: #{tpu_custom_call.1} parent=1 // pred_check
      _
    $region19: #{tpu_custom_call.1} parent=1 // pred_check_branch
      %21 = sbr.rel (0) target = $region21
    $region20: #{tpu_custom_call.1} parent=1 // pred_region
      _
    $region21: #{tpu_custom_call.1} parent=1 // pred_fallthru
      _
    // Predicated region
    $region22: #{tpu_custom_call.1} parent=1 // pred_check
      _
    $region23: #{tpu_custom_call.1} parent=1 // pred_check_branch
      %23 = sbr.rel (0) target = $region25
    $region24: #{tpu_custom_call.1} parent=1 // pred_region
      _
    $region25: #{tpu_custom_call.1} parent=1 // pred_fallthru
      _
    %v24 = vld [vmem:[%s0] sm:$0xff]
    %v25 = vld [vmem:[%s0 + $0x8] sm:$0xff]
    %v28 = vrot.slane %v24, 7
    %v29 = vrot.slane %v25, 7
    %vm32 = vcmask 1040384
    %v33 = vsel %vm32, 0.0, %v28
    %v34 = vsel %vm32, 0.0, %v29
    %v35 = vrot.slane %v24, 1
    %v36 = vrot.slane %v25, 1
    %vm39 = vcmask 1046528
    %v40 = vsel %vm39, %v35, 0.0
    %v41 = vsel %vm39, %v36, 0.0
    %v42 = vld [vmem:[%s1] sm:$0xf]
    %s43 = scalar_lea.vmem %s1, 4
    %v44 = vld [vmem:[%s43] sm:$0xf]
    %vm45 = vcmask 31744
    %v46 = vsel %vm45, %v24, 0
    %v48 = vsel %vm45, %v25, 0
    %vm50 = vcmask 1043456
    %v52 = vsel %vm50, %v44, 0
    %54 = vmatprep.subr.mxu0 0.0
    %55 = vmatpush1.msra.mxu0 %v52
    %56 = vmatprep.subr.mxu0 0.0
    %57 = vmatpush1.msra.mxu0 0.0
    %58 = vmatprep.subr.mxu0 0.0
    %59 = vmatpush1.msra.mxu0 0.0
    %60 = vmatprep.subr.mxu0 0.0
    %61 = vmatpush1.msra.mxu0 0.0
    %62 = vmatprep.subr.mxu0 0.0
    %63 = vmatpush1.msra.mxu0 0.0
    %64 = vmatprep.subr.mxu0 0.0
    %65 = vmatpush1.msra.mxu0 0.0
    %66 = vmatprep.subr.mxu0 0.0
    %67 = vmatpush1.msra.mxu0 0.0
    %68 = vmatprep.subr.mxu0 0.0
    %69 = vmatpush1.msra.mxu0 0.0
    %70 = vmatprep.subr.mxu0 0.0
    %71 = vmatpush1.msra.mxu0 0.0
    %72 = vmatprep.subr.mxu0 0.0
    %73 = vmatpush1.msra.mxu0 0.0
    %74 = vmatprep.subr.mxu0 0.0
    %75 = vmatpush1.msra.mxu0 0.0
    %76 = vmatprep.subr.mxu0 0.0
    %77 = vmatpush1.msra.mxu0 0.0
    %78 = vmatprep.subr.mxu0 0.0
    %79 = vmatpush1.msra.mxu0 0.0
    %80 = vmatprep.subr.mxu0 0.0
    %81 = vmatpush1.msra.mxu0 0.0
    %82 = vmatprep.subr.mxu0 0.0
    %83 = vmatpush1.msra.mxu0 0.0
    %84 = vmatprep.subr.mxu0 0.0
    %85 = vmatpush1.msra.mxu0 0.0
    %86 = vmatprep.subr.mxu0 0.0
    %87 = vmatpush1.msra.mxu0 0.0
    %88 = vmatprep.subr.mxu0 0.0
    %89 = vmatpush1.msra.mxu0 0.0
    %90 = vmatprep.subr.mxu0 0.0
    %91 = vmatpush1.msra.mxu0 0.0
    %92 = vmatprep.subr.mxu0 0.0
    %93 = vmatpush1.msra.mxu0 0.0
    %94 = vmatprep.subr.mxu0 0.0
    %95 = vmatpush1.msra.mxu0 0.0
    %96 = vmatprep.subr.mxu0 0.0
    %97 = vmatpush1.msra.mxu0 0.0
    %98 = vmatprep.subr.mxu0 0.0
    %99 = vmatpush1.msra.mxu0 0.0
    %100 = vmatprep.subr.mxu0 0.0
    %101 = vmatpush1.msra.mxu0 0.0
    %102 = vmatprep.subr.mxu0 0.0
    %103 = vmatpush1.msra.mxu0 0.0
    %104 = vmatprep.subr.mxu0 0.0
    %105 = vmatpush1.msra.mxu0 0.0
    %106 = vmatprep.subr.mxu0 0.0
    %107 = vmatpush1.msra.mxu0 0.0
    %108 = vmatprep.subr.mxu0 0.0
    %109 = vmatpush1.msra.mxu0 0.0
    %110 = vmatprep.subr.mxu0 0.0
    %111 = vmatpush1.msra.mxu0 0.0
    %112 = vmatprep.subr.mxu0 0.0
    %113 = vmatpush1.msra.mxu0 0.0
    %114 = vmatprep.subr.mxu0 0.0
    %115 = vmatpush1.msra.mxu0 0.0
    %116 = vmatprep.subr.mxu0 0.0
    %117 = vmatpush1.msra.mxu0 0.0
    %118 = vmatprep.mubr.f32.mxu0 0.0
    %119 = vmatmul.mubr.f32.gmra.mrb[0].mxu0 %v46
    %v120 = vpop.f32.mrb[0].mxu0
    %v121 = vadd.f32 0.0, %v120
    %v122 = vpop.f32.mrb[0].mxu0
    %123 = vmatprep.mubr.f32.mxu0 0.0
    %124 = vmatmul.mubr.f32.gmra.mrb[0].mxu0 %v48
    %v125 = vpop.f32.mrb[0].mxu0
    %v126 = vadd.f32 0.0, %v125
    %v127 = vpop.f32.mrb[0].mxu0
    %128 = vdwg.mxu0
    %v130 = vsel %vm45, %v33, 0
    %v133 = vsel %vm45, %v34, 0
    %v136 = vsel %vm50, %v42, 0
    %138 = vmatprep.subr.mxu0 0.0
    %139 = vmatpush1.msra.mxu0 %v136
    %140 = vmatprep.subr.mxu0 0.0
    %141 = vmatpush1.msra.mxu0 0.0
    %142 = vmatprep.subr.mxu0 0.0
    %143 = vmatpush1.msra.mxu0 0.0
    %144 = vmatprep.subr.mxu0 0.0
    %145 = vmatpush1.msra.mxu0 0.0
    %146 = vmatprep.subr.mxu0 0.0
    %147 = vmatpush1.msra.mxu0 0.0
    %148 = vmatprep.subr.mxu0 0.0
    %149 = vmatpush1.msra.mxu0 0.0
    %150 = vmatprep.subr.mxu0 0.0
    %151 = vmatpush1.msra.mxu0 0.0
    %152 = vmatprep.subr.mxu0 0.0
    %153 = vmatpush1.msra.mxu0 0.0
    %154 = vmatprep.subr.mxu0 0.0
    %155 = vmatpush1.msra.mxu0 0.0
    %156 = vmatprep.subr.mxu0 0.0
    %157 = vmatpush1.msra.mxu0 0.0
    %158 = vmatprep.subr.mxu0 0.0
    %159 = vmatpush1.msra.mxu0 0.0
    %160 = vmatprep.subr.mxu0 0.0
    %161 = vmatpush1.msra.mxu0 0.0
    %162 = vmatprep.subr.mxu0 0.0
    %163 = vmatpush1.msra.mxu0 0.0
    %164 = vmatprep.subr.mxu0 0.0
    %165 = vmatpush1.msra.mxu0 0.0
    %166 = vmatprep.subr.mxu0 0.0
    %167 = vmatpush1.msra.mxu0 0.0
    %168 = vmatprep.subr.mxu0 0.0
    %169 = vmatpush1.msra.mxu0 0.0
    %170 = vmatprep.subr.mxu0 0.0
    %171 = vmatpush1.msra.mxu0 0.0
    %172 = vmatprep.subr.mxu0 0.0
    %173 = vmatpush1.msra.mxu0 0.0
    %174 = vmatprep.subr.mxu0 0.0
    %175 = vmatpush1.msra.mxu0 0.0
    %176 = vmatprep.subr.mxu0 0.0
    %177 = vmatpush1.msra.mxu0 0.0
    %178 = vmatprep.subr.mxu0 0.0
    %179 = vmatpush1.msra.mxu0 0.0
    %180 = vmatprep.subr.mxu0 0.0
    %181 = vmatpush1.msra.mxu0 0.0
    %182 = vmatprep.subr.mxu0 0.0
    %183 = vmatpush1.msra.mxu0 0.0
    %184 = vmatprep.subr.mxu0 0.0
    %185 = vmatpush1.msra.mxu0 0.0
    %186 = vmatprep.subr.mxu0 0.0
    %187 = vmatpush1.msra.mxu0 0.0
    %188 = vmatprep.subr.mxu0 0.0
    %189 = vmatpush1.msra.mxu0 0.0
    %190 = vmatprep.subr.mxu0 0.0
    %191 = vmatpush1.msra.mxu0 0.0
    %192 = vmatprep.subr.mxu0 0.0
    %193 = vmatpush1.msra.mxu0 0.0
    %194 = vmatprep.subr.mxu0 0.0
    %195 = vmatpush1.msra.mxu0 0.0
    %196 = vmatprep.subr.mxu0 0.0
    %197 = vmatpush1.msra.mxu0 0.0
    %198 = vmatprep.subr.mxu0 0.0
    %199 = vmatpush1.msra.mxu0 0.0
    %200 = vmatprep.subr.mxu0 0.0
    %201 = vmatpush1.msra.mxu0 0.0
    %202 = vmatprep.mubr.f32.mxu0 0.0
    %203 = vmatmul.mubr.f32.gmra.mrb[0].mxu0 %v130
    %v204 = vpop.f32.mrb[0].mxu0
    %v205 = vadd.f32 %v121, %v204
    %v206 = vpop.f32.mrb[0].mxu0
    %207 = vmatprep.mubr.f32.mxu0 0.0
    %208 = vmatmul.mubr.f32.gmra.mrb[0].mxu0 %v133
    %v209 = vpop.f32.mrb[0].mxu0
    %v210 = vadd.f32 %v126, %v209
    %v211 = vpop.f32.mrb[0].mxu0
    %212 = vdwg.mxu0
    %s213 = scalar_lea.vmem %s1, 8
    %v214 = vld [vmem:[%s213] sm:$0xf]
    %v216 = vsel %vm45, %v40, 0
    %v219 = vsel %vm45, %v41, 0
    %v222 = vsel %vm50, %v214, 0
    %224 = vmatprep.subr.mxu0 0.0
    %225 = vmatpush1.msra.mxu0 %v222
    %226 = vmatprep.subr.mxu0 0.0
    %227 = vmatpush1.msra.mxu0 0.0
    %228 = vmatprep.subr.mxu0 0.0
    %229 = vmatpush1.msra.mxu0 0.0
    %230 = vmatprep.subr.mxu0 0.0
    %231 = vmatpush1.msra.mxu0 0.0
    %232 = vmatprep.subr.mxu0 0.0
    %233 = vmatpush1.msra.mxu0 0.0
    %234 = vmatprep.subr.mxu0 0.0
    %235 = vmatpush1.msra.mxu0 0.0
    %236 = vmatprep.subr.mxu0 0.0
    %237 = vmatpush1.msra.mxu0 0.0
    %238 = vmatprep.subr.mxu0 0.0
    %239 = vmatpush1.msra.mxu0 0.0
    %240 = vmatprep.subr.mxu0 0.0
    %241 = vmatpush1.msra.mxu0 0.0
    %242 = vmatprep.subr.mxu0 0.0
    %243 = vmatpush1.msra.mxu0 0.0
    %244 = vmatprep.subr.mxu0 0.0
    %245 = vmatpush1.msra.mxu0 0.0
    %246 = vmatprep.subr.mxu0 0.0
    %247 = vmatpush1.msra.mxu0 0.0
    %248 = vmatprep.subr.mxu0 0.0
    %249 = vmatpush1.msra.mxu0 0.0
    %250 = vmatprep.subr.mxu0 0.0
    %251 = vmatpush1.msra.mxu0 0.0
    %252 = vmatprep.subr.mxu0 0.0
    %253 = vmatpush1.msra.mxu0 0.0
    %254 = vmatprep.subr.mxu0 0.0
    %255 = vmatpush1.msra.mxu0 0.0
    %256 = vmatprep.subr.mxu0 0.0
    %257 = vmatpush1.msra.mxu0 0.0
    %258 = vmatprep.subr.mxu0 0.0
    %259 = vmatpush1.msra.mxu0 0.0
    %260 = vmatprep.subr.mxu0 0.0
    %261 = vmatpush1.msra.mxu0 0.0
    %262 = vmatprep.subr.mxu0 0.0
    %263 = vmatpush1.msra.mxu0 0.0
    %264 = vmatprep.subr.mxu0 0.0
    %265 = vmatpush1.msra.mxu0 0.0
    %266 = vmatprep.subr.mxu0 0.0
    %267 = vmatpush1.msra.mxu0 0.0
    %268 = vmatprep.subr.mxu0 0.0
    %269 = vmatpush1.msra.mxu0 0.0
    %270 = vmatprep.subr.mxu0 0.0
    %271 = vmatpush1.msra.mxu0 0.0
    %272 = vmatprep.subr.mxu0 0.0
    %273 = vmatpush1.msra.mxu0 0.0
    %274 = vmatprep.subr.mxu0 0.0
    %275 = vmatpush1.msra.mxu0 0.0
    %276 = vmatprep.subr.mxu0 0.0
    %277 = vmatpush1.msra.mxu0 0.0
    %278 = vmatprep.subr.mxu0 0.0
    %279 = vmatpush1.msra.mxu0 0.0
    %280 = vmatprep.subr.mxu0 0.0
    %281 = vmatpush1.msra.mxu0 0.0
    %282 = vmatprep.subr.mxu0 0.0
    %283 = vmatpush1.msra.mxu0 0.0
    %284 = vmatprep.subr.mxu0 0.0
    %285 = vmatpush1.msra.mxu0 0.0
    %286 = vmatprep.subr.mxu0 0.0
    %287 = vmatpush1.msra.mxu0 0.0
    %288 = vmatprep.mubr.f32.mxu0 0.0
    %289 = vmatmul.mubr.f32.gmra.mrb[0].mxu0 %v216
    %v290 = vpop.f32.mrb[0].mxu0
    %v291 = vadd.f32 0.0, %v290
    %v292 = vpop.f32.mrb[0].mxu0
    %293 = vmatprep.mubr.f32.mxu0 0.0
    %294 = vmatmul.mubr.f32.gmra.mrb[0].mxu0 %v219
    %v295 = vpop.f32.mrb[0].mxu0
    %v296 = vadd.f32 0.0, %v295
    %v297 = vpop.f32.mrb[0].mxu0
    %298 = vdwg.mxu0
    %v299 = vadd.f32 %v205, %v291
    %v300 = vadd.f32 %v210, %v296
    %v301 = vld [vmem:[%s2] sm:$0x1]
    %v303 = vlaneseq
    %v304 = vshrl.u32 %v303, 7
    %v305 = vsub.s32 0, %v304
    %v306 = vrot.slane %v301, %v305
    %v308 = vadd.f32 %v299, %v306
    %v309 = vadd.f32 %v300, %v306
    %v310 = vmul.f32 %v24, %v24
    %v311 = vmul.f32 %v25, %v25
    %v312 = vsel %vm45, %v310, 0.0
    %313 = vadd.xlane.f32.xlu0 %v312
    %v314 = vpop.xlane.xlu0 %313
    %v315 = vsel %vm45, %v311, 0.0
    %316 = vadd.xlane.f32.xlu0 %v315
    %v317 = vpop.xlane.xlu0 %316
    %v318 = vadd.f32 %v314, 1e-24
    %v319 = vadd.f32 %v317, 1e-24
    %v320 = vrsqrt.pop %v318
    %v321 = vrsqrt.pop %v319
    %v322 = vmul.f32 %v24, %v320
    %v323 = vmul.f32 %v25, %v321
    %v324 = vld [vmem:[%s3] sm:$0xff]
    %v326 = vsel %vm45, %v324, 0
    %v329 = vsel %vm45, %v322, 0
    %331 = vmatprep.subr.mxu0 0.0
    %332 = vmatpush1.xpose.msra.mxu0 %v329
    %333 = vmatprep.subr.mxu0 0.0
    %334 = vmatpush1.xpose.msra.mxu0 0.0
    %335 = vmatprep.subr.mxu0 0.0
    %336 = vmatpush1.xpose.msra.mxu0 0.0
    %337 = vmatprep.subr.mxu0 0.0
    %338 = vmatpush1.xpose.msra.mxu0 0.0
    %339 = vmatprep.subr.mxu0 0.0
    %340 = vmatpush1.xpose.msra.mxu0 0.0
    %341 = vmatprep.subr.mxu0 0.0
    %342 = vmatpush1.xpose.msra.mxu0 0.0
    %343 = vmatprep.subr.mxu0 0.0
    %344 = vmatpush1.xpose.msra.mxu0 0.0
    %345 = vmatprep.subr.mxu0 0.0
    %346 = vmatpush1.xpose.msra.mxu0 0.0
    %347 = vmatprep.subr.mxu0 0.0
    %348 = vmatpush1.xpose.msra.mxu0 0.0
    %349 = vmatprep.subr.mxu0 0.0
    %350 = vmatpush1.xpose.msra.mxu0 0.0
    %351 = vmatprep.subr.mxu0 0.0
    %352 = vmatpush1.xpose.msra.mxu0 0.0
    %353 = vmatprep.subr.mxu0 0.0
    %354 = vmatpush1.xpose.msra.mxu0 0.0
    %355 = vmatprep.subr.mxu0 0.0
    %356 = vmatpush1.xpose.msra.mxu0 0.0
    %357 = vmatprep.subr.mxu0 0.0
    %358 = vmatpush1.xpose.msra.mxu0 0.0
    %359 = vmatprep.subr.mxu0 0.0
    %360 = vmatpush1.xpose.msra.mxu0 0.0
    %361 = vmatprep.subr.mxu0 0.0
    %362 = vmatpush1.xpose.msra.mxu0 0.0
    %363 = vmatprep.subr.mxu0 0.0
    %364 = vmatpush1.xpose.msra.mxu0 0.0
    %365 = vmatprep.subr.mxu0 0.0
    %366 = vmatpush1.xpose.msra.mxu0 0.0
    %367 = vmatprep.subr.mxu0 0.0
    %368 = vmatpush1.xpose.msra.mxu0 0.0
    %369 = vmatprep.subr.mxu0 0.0
    %370 = vmatpush1.xpose.msra.mxu0 0.0
    %371 = vmatprep.subr.mxu0 0.0
    %372 = vmatpush1.xpose.msra.mxu0 0.0
    %373 = vmatprep.subr.mxu0 0.0
    %374 = vmatpush1.xpose.msra.mxu0 0.0
    %375 = vmatprep.subr.mxu0 0.0
    %376 = vmatpush1.xpose.msra.mxu0 0.0
    %377 = vmatprep.subr.mxu0 0.0
    %378 = vmatpush1.xpose.msra.mxu0 0.0
    %379 = vmatprep.subr.mxu0 0.0
    %380 = vmatpush1.xpose.msra.mxu0 0.0
    %381 = vmatprep.subr.mxu0 0.0
    %382 = vmatpush1.xpose.msra.mxu0 0.0
    %383 = vmatprep.subr.mxu0 0.0
    %384 = vmatpush1.xpose.msra.mxu0 0.0
    %385 = vmatprep.subr.mxu0 0.0
    %386 = vmatpush1.xpose.msra.mxu0 0.0
    %387 = vmatprep.subr.mxu0 0.0
    %388 = vmatpush1.xpose.msra.mxu0 0.0
    %389 = vmatprep.subr.mxu0 0.0
    %390 = vmatpush1.xpose.msra.mxu0 0.0
    %391 = vmatprep.subr.mxu0 0.0
    %392 = vmatpush1.xpose.msra.mxu0 0.0
    %393 = vmatprep.subr.mxu0 0.0
    %394 = vmatpush1.xpose.msra.mxu0 0.0
    %395 = vmatprep.mubr.f32.mxu0 0.0
    %396 = vmatmul.mubr.f32.gmra.mrb[0].mxu0 %v326
    %v397 = vpop.f32.mrb[0].mxu0
    %v398 = vadd.f32 0.0, %v397
    %v399 = vpop.f32.mrb[0].mxu0
    %400 = vdwg.mxu0
    %v402 = vsel %vm45, %v323, 0
    %404 = vmatprep.subr.mxu0 0.0
    %405 = vmatpush1.xpose.msra.mxu0 %v402
    %406 = vmatprep.subr.mxu0 0.0
    %407 = vmatpush1.xpose.msra.mxu0 0.0
    %408 = vmatprep.subr.mxu0 0.0
    %409 = vmatpush1.xpose.msra.mxu0 0.0
    %410 = vmatprep.subr.mxu0 0.0
    %411 = vmatpush1.xpose.msra.mxu0 0.0
    %412 = vmatprep.subr.mxu0 0.0
    %413 = vmatpush1.xpose.msra.mxu0 0.0
    %414 = vmatprep.subr.mxu0 0.0
    %415 = vmatpush1.xpose.msra.mxu0 0.0
    %416 = vmatprep.subr.mxu0 0.0
    %417 = vmatpush1.xpose.msra.mxu0 0.0
    %418 = vmatprep.subr.mxu0 0.0
    %419 = vmatpush1.xpose.msra.mxu0 0.0
    %420 = vmatprep.subr.mxu0 0.0
    %421 = vmatpush1.xpose.msra.mxu0 0.0
    %422 = vmatprep.subr.mxu0 0.0
    %423 = vmatpush1.xpose.msra.mxu0 0.0
    %424 = vmatprep.subr.mxu0 0.0
    %425 = vmatpush1.xpose.msra.mxu0 0.0
    %426 = vmatprep.subr.mxu0 0.0
    %427 = vmatpush1.xpose.msra.mxu0 0.0
    %428 = vmatprep.subr.mxu0 0.0
    %429 = vmatpush1.xpose.msra.mxu0 0.0
    %430 = vmatprep.subr.mxu0 0.0
    %431 = vmatpush1.xpose.msra.mxu0 0.0
    %432 = vmatprep.subr.mxu0 0.0
    %433 = vmatpush1.xpose.msra.mxu0 0.0
    %434 = vmatprep.subr.mxu0 0.0
    %435 = vmatpush1.xpose.msra.mxu0 0.0
    %436 = vmatprep.subr.mxu0 0.0
    %437 = vmatpush1.xpose.msra.mxu0 0.0
    %438 = vmatprep.subr.mxu0 0.0
    %439 = vmatpush1.xpose.msra.mxu0 0.0
    %440 = vmatprep.subr.mxu0 0.0
    %441 = vmatpush1.xpose.msra.mxu0 0.0
    %442 = vmatprep.subr.mxu0 0.0
    %443 = vmatpush1.xpose.msra.mxu0 0.0
    %444 = vmatprep.subr.mxu0 0.0
    %445 = vmatpush1.xpose.msra.mxu0 0.0
    %446 = vmatprep.subr.mxu0 0.0
    %447 = vmatpush1.xpose.msra.mxu0 0.0
    %448 = vmatprep.subr.mxu0 0.0
    %449 = vmatpush1.xpose.msra.mxu0 0.0
    %450 = vmatprep.subr.mxu0 0.0
    %451 = vmatpush1.xpose.msra.mxu0 0.0
    %452 = vmatprep.subr.mxu0 0.0
    %453 = vmatpush1.xpose.msra.mxu0 0.0
    %454 = vmatprep.subr.mxu0 0.0
    %455 = vmatpush1.xpose.msra.mxu0 0.0
    %456 = vmatprep.subr.mxu0 0.0
    %457 = vmatpush1.xpose.msra.mxu0 0.0
    %458 = vmatprep.subr.mxu0 0.0
    %459 = vmatpush1.xpose.msra.mxu0 0.0
    %460 = vmatprep.subr.mxu0 0.0
    %461 = vmatpush1.xpose.msra.mxu0 0.0
    %462 = vmatprep.subr.mxu0 0.0
    %463 = vmatpush1.xpose.msra.mxu0 0.0
    %464 = vmatprep.subr.mxu0 0.0
    %465 = vmatpush1.xpose.msra.mxu0 0.0
    %466 = vmatprep.subr.mxu0 0.0
    %467 = vmatpush1.xpose.msra.mxu0 0.0
    %468 = vmatprep.mubr.f32.mxu0 0.0
    %469 = vmatmul.mubr.f32.gmra.mrb[0].mxu0 %v326
    %v470 = vpop.f32.mrb[0].mxu0
    %v471 = vadd.f32 0.0, %v470
    %v472 = vpop.f32.mrb[0].mxu0
    %473 = vdwg.mxu0
    %v474 = vld [vmem:[%s4] sm:$0xff]
    %476 = vset.pattern.permute.xlu0 0
    %477 = vperm.xlu0 %476, %v474
    %v478 = vpop.permute.xlu0 %477
    %vm480 = vcmask 64512
    %v482 = vsel %vm480, %v398, 0
    %484 = vmatprep.subr.mxu0 0.0
    %485 = vmatpush1.msra.mxu0 %v322
    %486 = vmatprep.subr.mxu0 0.0
    %487 = vmatpush1.msra.mxu0 0.0
    %488 = vmatprep.subr.mxu0 0.0
    %489 = vmatpush1.msra.mxu0 0.0
    %490 = vmatprep.subr.mxu0 0.0
    %491 = vmatpush1.msra.mxu0 0.0
    %492 = vmatprep.subr.mxu0 0.0
    %493 = vmatpush1.msra.mxu0 0.0
    %494 = vmatprep.subr.mxu0 0.0
    %495 = vmatpush1.msra.mxu0 0.0
    %496 = vmatprep.subr.mxu0 0.0
    %497 = vmatpush1.msra.mxu0 0.0
    %498 = vmatprep.subr.mxu0 0.0
    %499 = vmatpush1.msra.mxu0 0.0
    %500 = vmatprep.subr.mxu0 0.0
    %501 = vmatpush1.msra.mxu0 0.0
    %502 = vmatprep.subr.mxu0 0.0
    %503 = vmatpush1.msra.mxu0 0.0
    %504 = vmatprep.subr.mxu0 0.0
    %505 = vmatpush1.msra.mxu0 0.0
    %506 = vmatprep.subr.mxu0 0.0
    %507 = vmatpush1.msra.mxu0 0.0
    %508 = vmatprep.subr.mxu0 0.0
    %509 = vmatpush1.msra.mxu0 0.0
    %510 = vmatprep.subr.mxu0 0.0
    %511 = vmatpush1.msra.mxu0 0.0
    %512 = vmatprep.subr.mxu0 0.0
    %513 = vmatpush1.msra.mxu0 0.0
    %514 = vmatprep.subr.mxu0 0.0
    %515 = vmatpush1.msra.mxu0 0.0
    %516 = vmatprep.subr.mxu0 0.0
    %517 = vmatpush1.msra.mxu0 0.0
    %518 = vmatprep.subr.mxu0 0.0
    %519 = vmatpush1.msra.mxu0 0.0
    %520 = vmatprep.subr.mxu0 0.0
    %521 = vmatpush1.msra.mxu0 0.0
    %522 = vmatprep.subr.mxu0 0.0
    %523 = vmatpush1.msra.mxu0 0.0
    %524 = vmatprep.subr.mxu0 0.0
    %525 = vmatpush1.msra.mxu0 0.0
    %526 = vmatprep.subr.mxu0 0.0
    %527 = vmatpush1.msra.mxu0 0.0
    %528 = vmatprep.subr.mxu0 0.0
    %529 = vmatpush1.msra.mxu0 0.0
    %530 = vmatprep.subr.mxu0 0.0
    %531 = vmatpush1.msra.mxu0 0.0
    %532 = vmatprep.subr.mxu0 0.0
    %533 = vmatpush1.msra.mxu0 0.0
    %534 = vmatprep.subr.mxu0 0.0
    %535 = vmatpush1.msra.mxu0 0.0
    %536 = vmatprep.subr.mxu0 0.0
    %537 = vmatpush1.msra.mxu0 0.0
    %538 = vmatprep.subr.mxu0 0.0
    %539 = vmatpush1.msra.mxu0 0.0
    %540 = vmatprep.subr.mxu0 0.0
    %541 = vmatpush1.msra.mxu0 0.0
    %542 = vmatprep.subr.mxu0 0.0
    %543 = vmatpush1.msra.mxu0 0.0
    %544 = vmatprep.subr.mxu0 0.0
    %545 = vmatpush1.msra.mxu0 0.0
    %546 = vmatprep.subr.mxu0 0.0
    %547 = vmatpush1.msra.mxu0 0.0
    %548 = vmatprep.mubr.f32.mxu0 0.0
    %549 = vmatmul.mubr.f32.gmra.mrb[0].mxu0 %v482
    %v550 = vpop.f32.mrb[0].mxu0
    %v551 = vadd.f32 %v478, %v550
    %v552 = vpop.f32.mrb[0].mxu0
    %553 = vdwg.mxu0
    %v555 = vsel %vm480, %v471, 0
    %557 = vmatprep.subr.mxu0 0.0
    %558 = vmatpush1.msra.mxu0 %v323
    %559 = vmatprep.subr.mxu0 0.0
    %560 = vmatpush1.msra.mxu0 0.0
    %561 = vmatprep.subr.mxu0 0.0
    %562 = vmatpush1.msra.mxu0 0.0
    %563 = vmatprep.subr.mxu0 0.0
    %564 = vmatpush1.msra.mxu0 0.0
    %565 = vmatprep.subr.mxu0 0.0
    %566 = vmatpush1.msra.mxu0 0.0
    %567 = vmatprep.subr.mxu0 0.0
    %568 = vmatpush1.msra.mxu0 0.0
    %569 = vmatprep.subr.mxu0 0.0
    %570 = vmatpush1.msra.mxu0 0.0
    %571 = vmatprep.subr.mxu0 0.0
    %572 = vmatpush1.msra.mxu0 0.0
    %573 = vmatprep.subr.mxu0 0.0
    %574 = vmatpush1.msra.mxu0 0.0
    %575 = vmatprep.subr.mxu0 0.0
    %576 = vmatpush1.msra.mxu0 0.0
    %577 = vmatprep.subr.mxu0 0.0
    %578 = vmatpush1.msra.mxu0 0.0
    %579 = vmatprep.subr.mxu0 0.0
    %580 = vmatpush1.msra.mxu0 0.0
    %581 = vmatprep.subr.mxu0 0.0
    %582 = vmatpush1.msra.mxu0 0.0
    %583 = vmatprep.subr.mxu0 0.0
    %584 = vmatpush1.msra.mxu0 0.0
    %585 = vmatprep.subr.mxu0 0.0
    %586 = vmatpush1.msra.mxu0 0.0
    %587 = vmatprep.subr.mxu0 0.0
    %588 = vmatpush1.msra.mxu0 0.0
    %589 = vmatprep.subr.mxu0 0.0
    %590 = vmatpush1.msra.mxu0 0.0
    %591 = vmatprep.subr.mxu0 0.0
    %592 = vmatpush1.msra.mxu0 0.0
    %593 = vmatprep.subr.mxu0 0.0
    %594 = vmatpush1.msra.mxu0 0.0
    %595 = vmatprep.subr.mxu0 0.0
    %596 = vmatpush1.msra.mxu0 0.0
    %597 = vmatprep.subr.mxu0 0.0
    %598 = vmatpush1.msra.mxu0 0.0
    %599 = vmatprep.subr.mxu0 0.0
    %600 = vmatpush1.msra.mxu0 0.0
    %601 = vmatprep.subr.mxu0 0.0
    %602 = vmatpush1.msra.mxu0 0.0
    %603 = vmatprep.subr.mxu0 0.0
    %604 = vmatpush1.msra.mxu0 0.0
    %605 = vmatprep.subr.mxu0 0.0
    %606 = vmatpush1.msra.mxu0 0.0
    %607 = vmatprep.subr.mxu0 0.0
    %608 = vmatpush1.msra.mxu0 0.0
    %609 = vmatprep.subr.mxu0 0.0
    %610 = vmatpush1.msra.mxu0 0.0
    %611 = vmatprep.subr.mxu0 0.0
    %612 = vmatpush1.msra.mxu0 0.0
    %613 = vmatprep.subr.mxu0 0.0
    %614 = vmatpush1.msra.mxu0 0.0
    %615 = vmatprep.subr.mxu0 0.0
    %616 = vmatpush1.msra.mxu0 0.0
    %617 = vmatprep.subr.mxu0 0.0
    %618 = vmatpush1.msra.mxu0 0.0
    %619 = vmatprep.subr.mxu0 0.0
    %620 = vmatpush1.msra.mxu0 0.0
    %621 = vmatprep.mubr.f32.mxu0 0.0
    %622 = vmatmul.mubr.f32.gmra.mrb[0].mxu0 %v555
    %v623 = vpop.f32.mrb[0].mxu0
    %v624 = vadd.f32 %v478, %v623
    %v625 = vpop.f32.mrb[0].mxu0
    %626 = vdwg.mxu0
    %v627 = vmax.f32 %v551, 0.0
    %v628 = vmax.f32 %v624, 0.0
    %v629 = vadd.f32 %v308, %v627
    %v630 = vadd.f32 %v309, %v628
    %v633 = vrot.slane %v629, 7
    %v634 = vrot.slane %v630, 7
    %v637 = vsel %vm32, %v633, %v633
    %v638 = vsel %vm32, %v634, %v634
    %v639 = vrot.slane %v629, 1
    %v640 = vrot.slane %v630, 1
    %v643 = vsel %vm39, %v639, %v639
    %v644 = vsel %vm39, %v640, %v640
    %v645 = vld [vmem:[%s5] sm:$0xf]
    %s646 = scalar_lea.vmem %s5, 4
    %v647 = vld [vmem:[%s646] sm:$0xf]
    %v648 = vsel %vm45, %v629, 0
    %v650 = vsel %vm45, %v630, 0
    %v653 = vsel %vm50, %v647, 0
    %655 = vmatprep.subr.mxu0 0.0
    %656 = vmatpush1.msra.mxu0 %v653
    %657 = vmatprep.subr.mxu0 0.0
    %658 = vmatpush1.msra.mxu0 0.0
    %659 = vmatprep.subr.mxu0 0.0
    %660 = vmatpush1.msra.mxu0 0.0
    %661 = vmatprep.subr.mxu0 0.0
    %662 = vmatpush1.msra.mxu0 0.0
    %663 = vmatprep.subr.mxu0 0.0
    %664 = vmatpush1.msra.mxu0 0.0
    %665 = vmatprep.subr.mxu0 0.0
    %666 = vmatpush1.msra.mxu0 0.0
    %667 = vmatprep.subr.mxu0 0.0
    %668 = vmatpush1.msra.mxu0 0.0
    %669 = vmatprep.subr.mxu0 0.0
    %670 = vmatpush1.msra.mxu0 0.0
    %671 = vmatprep.subr.mxu0 0.0
    %672 = vmatpush1.msra.mxu0 0.0
    %673 = vmatprep.subr.mxu0 0.0
    %674 = vmatpush1.msra.mxu0 0.0
    %675 = vmatprep.subr.mxu0 0.0
    %676 = vmatpush1.msra.mxu0 0.0
    %677 = vmatprep.subr.mxu0 0.0
    %678 = vmatpush1.msra.mxu0 0.0
    %679 = vmatprep.subr.mxu0 0.0
    %680 = vmatpush1.msra.mxu0 0.0
    %681 = vmatprep.subr.mxu0 0.0
    %682 = vmatpush1.msra.mxu0 0.0
    %683 = vmatprep.subr.mxu0 0.0
    %684 = vmatpush1.msra.mxu0 0.0
    %685 = vmatprep.subr.mxu0 0.0
    %686 = vmatpush1.msra.mxu0 0.0
    %687 = vmatprep.subr.mxu0 0.0
    %688 = vmatpush1.msra.mxu0 0.0
    %689 = vmatprep.subr.mxu0 0.0
    %690 = vmatpush1.msra.mxu0 0.0
    %691 = vmatprep.subr.mxu0 0.0
    %692 = vmatpush1.msra.mxu0 0.0
    %693 = vmatprep.subr.mxu0 0.0
    %694 = vmatpush1.msra.mxu0 0.0
    %695 = vmatprep.subr.mxu0 0.0
    %696 = vmatpush1.msra.mxu0 0.0
    %697 = vmatprep.subr.mxu0 0.0
    %698 = vmatpush1.msra.mxu0 0.0
    %699 = vmatprep.subr.mxu0 0.0
    %700 = vmatpush1.msra.mxu0 0.0
    %701 = vmatprep.subr.mxu0 0.0
    %702 = vmatpush1.msra.mxu0 0.0
    %703 = vmatprep.subr.mxu0 0.0
    %704 = vmatpush1.msra.mxu0 0.0
    %705 = vmatprep.subr.mxu0 0.0
    %706 = vmatpush1.msra.mxu0 0.0
    %707 = vmatprep.subr.mxu0 0.0
    %708 = vmatpush1.msra.mxu0 0.0
    %709 = vmatprep.subr.mxu0 0.0
    %710 = vmatpush1.msra.mxu0 0.0
    %711 = vmatprep.subr.mxu0 0.0
    %712 = vmatpush1.msra.mxu0 0.0
    %713 = vmatprep.subr.mxu0 0.0
    %714 = vmatpush1.msra.mxu0 0.0
    %715 = vmatprep.subr.mxu0 0.0
    %716 = vmatpush1.msra.mxu0 0.0
    %717 = vmatprep.subr.mxu0 0.0
    %718 = vmatpush1.msra.mxu0 0.0
    %719 = vmatprep.mubr.f32.mxu0 0.0
    %720 = vmatmul.mubr.f32.gmra.mrb[0].mxu0 %v648
    %v721 = vpop.f32.mrb[0].mxu0
    %v722 = vadd.f32 0.0, %v721
    %v723 = vpop.f32.mrb[0].mxu0
    %724 = vmatprep.mubr.f32.mxu0 0.0
    %725 = vmatmul.mubr.f32.gmra.mrb[0].mxu0 %v650
    %v726 = vpop.f32.mrb[0].mxu0
    %v727 = vadd.f32 0.0, %v726
    %v728 = vpop.f32.mrb[0].mxu0
    %729 = vdwg.mxu0
    %v731 = vsel %vm45, %v637, 0
    %v734 = vsel %vm45, %v638, 0
    %v737 = vsel %vm50, %v645, 0
    %739 = vmatprep.subr.mxu0 0.0
    %740 = vmatpush1.msra.mxu0 %v737
    %741 = vmatprep.subr.mxu0 0.0
    %742 = vmatpush1.msra.mxu0 0.0
    %743 = vmatprep.subr.mxu0 0.0
    %744 = vmatpush1.msra.mxu0 0.0
    %745 = vmatprep.subr.mxu0 0.0
    %746 = vmatpush1.msra.mxu0 0.0
    %747 = vmatprep.subr.mxu0 0.0
    %748 = vmatpush1.msra.mxu0 0.0
    %749 = vmatprep.subr.mxu0 0.0
    %750 = vmatpush1.msra.mxu0 0.0
    %751 = vmatprep.subr.mxu0 0.0
    %752 = vmatpush1.msra.mxu0 0.0
    %753 = vmatprep.subr.mxu0 0.0
    %754 = vmatpush1.msra.mxu0 0.0
    %755 = vmatprep.subr.mxu0 0.0
    %756 = vmatpush1.msra.mxu0 0.0
    %757 = vmatprep.subr.mxu0 0.0
    %758 = vmatpush1.msra.mxu0 0.0
    %759 = vmatprep.subr.mxu0 0.0
    %760 = vmatpush1.msra.mxu0 0.0
    %761 = vmatprep.subr.mxu0 0.0
    %762 = vmatpush1.msra.mxu0 0.0
    %763 = vmatprep.subr.mxu0 0.0
    %764 = vmatpush1.msra.mxu0 0.0
    %765 = vmatprep.subr.mxu0 0.0
    %766 = vmatpush1.msra.mxu0 0.0
    %767 = vmatprep.subr.mxu0 0.0
    %768 = vmatpush1.msra.mxu0 0.0
    %769 = vmatprep.subr.mxu0 0.0
    %770 = vmatpush1.msra.mxu0 0.0
    %771 = vmatprep.subr.mxu0 0.0
    %772 = vmatpush1.msra.mxu0 0.0
    %773 = vmatprep.subr.mxu0 0.0
    %774 = vmatpush1.msra.mxu0 0.0
    %775 = vmatprep.subr.mxu0 0.0
    %776 = vmatpush1.msra.mxu0 0.0
    %777 = vmatprep.subr.mxu0 0.0
    %778 = vmatpush1.msra.mxu0 0.0
    %779 = vmatprep.subr.mxu0 0.0
    %780 = vmatpush1.msra.mxu0 0.0
    %781 = vmatprep.subr.mxu0 0.0
    %782 = vmatpush1.msra.mxu0 0.0
    %783 = vmatprep.subr.mxu0 0.0
    %784 = vmatpush1.msra.mxu0 0.0
    %785 = vmatprep.subr.mxu0 0.0
    %786 = vmatpush1.msra.mxu0 0.0
    %787 = vmatprep.subr.mxu0 0.0
    %788 = vmatpush1.msra.mxu0 0.0
    %789 = vmatprep.subr.mxu0 0.0
    %790 = vmatpush1.msra.mxu0 0.0
    %791 = vmatprep.subr.mxu0 0.0
    %792 = vmatpush1.msra.mxu0 0.0
    %793 = vmatprep.subr.mxu0 0.0
    %794 = vmatpush1.msra.mxu0 0.0
    %795 = vmatprep.subr.mxu0 0.0
    %796 = vmatpush1.msra.mxu0 0.0
    %797 = vmatprep.subr.mxu0 0.0
    %798 = vmatpush1.msra.mxu0 0.0
    %799 = vmatprep.subr.mxu0 0.0
    %800 = vmatpush1.msra.mxu0 0.0
    %801 = vmatprep.subr.mxu0 0.0
    %802 = vmatpush1.msra.mxu0 0.0
    %803 = vmatprep.mubr.f32.mxu0 0.0
    %804 = vmatmul.mubr.f32.gmra.mrb[0].mxu0 %v731
    %v805 = vpop.f32.mrb[0].mxu0
    %v806 = vadd.f32 %v722, %v805
    %v807 = vpop.f32.mrb[0].mxu0
    %808 = vmatprep.mubr.f32.mxu0 0.0
    %809 = vmatmul.mubr.f32.gmra.mrb[0].mxu0 %v734
    %v810 = vpop.f32.mrb[0].mxu0
    %v811 = vadd.f32 %v727, %v810
    %v812 = vpop.f32.mrb[0].mxu0
    %813 = vdwg.mxu0
    %s814 = scalar_lea.vmem %s5, 8
    %v815 = vld [vmem:[%s814] sm:$0xf]
    %v817 = vsel %vm45, %v643, 0
    %v820 = vsel %vm45, %v644, 0
    %v823 = vsel %vm50, %v815, 0
    %825 = vmatprep.subr.mxu0 0.0
    %826 = vmatpush1.msra.mxu0 %v823
    %827 = vmatprep.subr.mxu0 0.0
    %828 = vmatpush1.msra.mxu0 0.0
    %829 = vmatprep.subr.mxu0 0.0
    %830 = vmatpush1.msra.mxu0 0.0
    %831 = vmatprep.subr.mxu0 0.0
    %832 = vmatpush1.msra.mxu0 0.0
    %833 = vmatprep.subr.mxu0 0.0
    %834 = vmatpush1.msra.mxu0 0.0
    %835 = vmatprep.subr.mxu0 0.0
    %836 = vmatpush1.msra.mxu0 0.0
    %837 = vmatprep.subr.mxu0 0.0
    %838 = vmatpush1.msra.mxu0 0.0
    %839 = vmatprep.subr.mxu0 0.0
    %840 = vmatpush1.msra.mxu0 0.0
    %841 = vmatprep.subr.mxu0 0.0
    %842 = vmatpush1.msra.mxu0 0.0
    %843 = vmatprep.subr.mxu0 0.0
    %844 = vmatpush1.msra.mxu0 0.0
    %845 = vmatprep.subr.mxu0 0.0
    %846 = vmatpush1.msra.mxu0 0.0
    %847 = vmatprep.subr.mxu0 0.0
    %848 = vmatpush1.msra.mxu0 0.0
    %849 = vmatprep.subr.mxu0 0.0
    %850 = vmatpush1.msra.mxu0 0.0
    %851 = vmatprep.subr.mxu0 0.0
    %852 = vmatpush1.msra.mxu0 0.0
    %853 = vmatprep.subr.mxu0 0.0
    %854 = vmatpush1.msra.mxu0 0.0
    %855 = vmatprep.subr.mxu0 0.0
    %856 = vmatpush1.msra.mxu0 0.0
    %857 = vmatprep.subr.mxu0 0.0
    %858 = vmatpush1.msra.mxu0 0.0
    %859 = vmatprep.subr.mxu0 0.0
    %860 = vmatpush1.msra.mxu0 0.0
    %861 = vmatprep.subr.mxu0 0.0
    %862 = vmatpush1.msra.mxu0 0.0
    %863 = vmatprep.subr.mxu0 0.0
    %864 = vmatpush1.msra.mxu0 0.0
    %865 = vmatprep.subr.mxu0 0.0
    %866 = vmatpush1.msra.mxu0 0.0
    %867 = vmatprep.subr.mxu0 0.0
    %868 = vmatpush1.msra.mxu0 0.0
    %869 = vmatprep.subr.mxu0 0.0
    %870 = vmatpush1.msra.mxu0 0.0
    %871 = vmatprep.subr.mxu0 0.0
    %872 = vmatpush1.msra.mxu0 0.0
    %873 = vmatprep.subr.mxu0 0.0
    %874 = vmatpush1.msra.mxu0 0.0
    %875 = vmatprep.subr.mxu0 0.0
    %876 = vmatpush1.msra.mxu0 0.0
    %877 = vmatprep.subr.mxu0 0.0
    %878 = vmatpush1.msra.mxu0 0.0
    %879 = vmatprep.subr.mxu0 0.0
    %880 = vmatpush1.msra.mxu0 0.0
    %881 = vmatprep.subr.mxu0 0.0
    %882 = vmatpush1.msra.mxu0 0.0
    %883 = vmatprep.subr.mxu0 0.0
    %884 = vmatpush1.msra.mxu0 0.0
    %885 = vmatprep.subr.mxu0 0.0
    %886 = vmatpush1.msra.mxu0 0.0
    %887 = vmatprep.subr.mxu0 0.0
    %888 = vmatpush1.msra.mxu0 0.0
    %889 = vmatprep.mubr.f32.mxu0 0.0
    %890 = vmatmul.mubr.f32.gmra.mrb[0].mxu0 %v817
    %v891 = vpop.f32.mrb[0].mxu0
    %v892 = vadd.f32 0.0, %v891
    %v893 = vpop.f32.mrb[0].mxu0
    %894 = vmatprep.mubr.f32.mxu0 0.0
    %895 = vmatmul.mubr.f32.gmra.mrb[0].mxu0 %v820
    %v896 = vpop.f32.mrb[0].mxu0
    %v897 = vadd.f32 0.0, %v896
    %v898 = vpop.f32.mrb[0].mxu0
    %899 = vdwg.mxu0
    %v900 = vadd.f32 %v806, %v892
    %v901 = vadd.f32 %v811, %v897
    %902 = vst [vmem:[#allocation2] sm:$0xff] %v900
    %903 = vst [vmem:[#allocation2 + $0x8] sm:$0xff] %v901
    // Predicated region
    $region26: #{tpu_custom_call.1} parent=1 // pred_check
      _
    $region27: #{tpu_custom_call.1} parent=1 // pred_check_branch
      %905 = sbr.rel (0) target = $region29
    $region28: #{tpu_custom_call.1} parent=1 // pred_region
      %s907 = ssub.s32 256, 256
      %908 = vsyncadd [#allocation3], %s907
      %s909 = sshll.u32 [#allocation2], 4
      %s910 = int_to_ptr.vmem [resolvable:$true] %s909
      %915 = dma.vmem_to_hbm [thread:$0]  %s910, 256, %s6, [#allocation3], 128, 128, 8
    $region29: #{tpu_custom_call.1} parent=1 // pred_fallthru
      _
    // Predicated region
    $region30: #{tpu_custom_call.1} parent=1 // pred_check
      _
    $region31: #{tpu_custom_call.1} parent=1 // pred_check_branch
      %917 = sbr.rel (0) target = $region33
    $region32: #{tpu_custom_call.1} parent=1 // pred_region
      %918 = dma.done [#allocation3], 256
    $region33: #{tpu_custom_call.1} parent=1 // pred_fallthru
      _
    %919 = vsyncpa [#allocation3], 1

</llo_original>
